<compile_context>
chip_gen: v7x
topology: tpu7x:2x2x1
jax: 0.10.0
libtpu: 0.0.40
codegen_flags: <defaults>
</compile_context>

<pallas_src>
import functools
import math

import jax
import jax.numpy as jnp
from jax import lax
from jax.experimental import pallas as pl
from jax.experimental.pallas import tpu as pltpu


_LANE = 512                    # lane-axis width per tile (multiple of 128, lane-dense)
_SUBLANE = 8                   # f32 sublanes per vreg
_CHUNK_ROWS = 256              # in-kernel reduction chunk (256*512*4B = 512 KiB f32 temps)
_ROW_ALIGN = 16                # keep blocks multiples of 16 sublanes (bf16 packs 16/vreg)
_TARGET_TILE_BYTES = 4 << 20   # ~4 MiB per input per pipeline buffer (all generations)


def _round_up(a, b):
    return (a + b - 1) // b * b


def _charbonnier_kernel(x_ref, y_ref, out_ref, *, eps, block_rows, lane,
                        chunk_rows, valid_rows_last, num_blocks):
    """One grid step: reduce a (block_rows, lane) tile to an (8, lane) partial."""

    def block_partial(valid_rows):
        # `valid_rows` is a Python int: number of in-bounds rows of this block.
        acc = jnp.zeros((_SUBLANE, lane), jnp.float32)
        n_live = -(-valid_rows // chunk_rows)   # chunks fully OOB are skipped statically
        for c in range(n_live):
            r0 = c * chunk_rows                 # static start -> aligned vector loads
            xs = x_ref[pl.ds(r0, chunk_rows), :].astype(jnp.float32)
            ys = y_ref[pl.ds(r0, chunk_rows), :].astype(jnp.float32)
            d = xs - ys
            v = jnp.sqrt(d * d + jnp.float32(eps))
            rows_left = valid_rows - r0
            if rows_left < chunk_rows:
                # Only the single straddling chunk of the last block pays for this.
                row = lax.broadcasted_iota(jnp.int32, v.shape, 0)
                v = jnp.where(row < rows_left, v, jnp.float32(0.0))
            # (chunk_rows, lane) -> (chunk_rows//8, 8, lane): layout-preserving split,
            # sum over the major axis is pure VPU vreg adds (no XLU).
            acc = acc + v.reshape(chunk_rows // _SUBLANE, _SUBLANE, lane).sum(axis=0)
        return acc

    if valid_rows_last == block_rows:
        # Every block is full: single unconditional path, zero mask work.
        out_ref[...] = block_partial(block_rows)
    else:
        i = pl.program_id(0)

        @pl.when(i < num_blocks - 1)
        def _():
            out_ref[...] = block_partial(block_rows)

        @pl.when(i == num_blocks - 1)
        def _():
            out_ref[...] = block_partial(valid_rows_last)


def charbonnier_loss_pallas(x, y, eps=1e-6):
    """Charbonnier loss: sum(sqrt((x - y)^2 + eps)). Any shape, any float dtype."""
    assert x.shape == y.shape, (x.shape, y.shape)
    n_valid = math.prod(x.shape)
    if n_valid == 0:
        return jnp.float32(0.0)

    lane = _LANE
    xf = x.reshape(-1)
    yf = y.reshape(-1)

    rows = n_valid // lane
    tail = n_valid - rows * lane

    tail_sum = jnp.float32(0.0)
    if tail:
        # Sub-512-element remainder: plain XLA (tiny).  The lane-aligned bulk
        # streams through the kernel; no full-array pad/concatenate is built.
        xt = xf[rows * lane:].astype(jnp.float32)
        yt = yf[rows * lane:].astype(jnp.float32)
        dt = xt - yt
        tail_sum = jnp.sum(jnp.sqrt(dt * dt + jnp.float32(eps)))
        if rows == 0:
            return tail_sum
        xf = xf[:rows * lane]
        yf = yf[:rows * lane]

    x2 = xf.reshape(rows, lane)
    y2 = yf.reshape(rows, lane)

    # Byte-based block sizing: same DMA-efficiency point for bf16 and f32.
    itemsize = jnp.dtype(x.dtype).itemsize
    target_rows = max(_ROW_ALIGN,
                      (_TARGET_TILE_BYTES // (lane * itemsize)) // _ROW_ALIGN * _ROW_ALIGN)
    block_rows = min(target_rows, _round_up(rows, _ROW_ALIGN))
    if block_rows >= _CHUNK_ROWS:
        block_rows = _round_up(block_rows, _CHUNK_ROWS)
        chunk_rows = _CHUNK_ROWS
    else:
        chunk_rows = block_rows
    num_blocks = pl.cdiv(rows, block_rows)
    valid_rows_last = rows - (num_blocks - 1) * block_rows

    # VMEM budget: double-buffered inputs + partial-sum blocks + f32 chunk
    # temporaries, with headroom; capped so it fits v7x's 64 MiB VMEM per TC.
    in_bytes = 2 * 2 * block_rows * lane * itemsize          # 2 inputs x 2 buffers
    out_bytes = 2 * _SUBLANE * lane * 4                      # partial-sum blocks
    vmem_limit = int(min(40 << 20, max(16 << 20, in_bytes + out_bytes + (8 << 20))))

    kernel = functools.partial(
        _charbonnier_kernel, eps=float(eps), block_rows=block_rows, lane=lane,
        chunk_rows=chunk_rows, valid_rows_last=valid_rows_last,
        num_blocks=int(num_blocks))

    partials = pl.pallas_call(
        kernel,
        out_shape=jax.ShapeDtypeStruct((num_blocks * _SUBLANE, lane), jnp.float32),
        grid_spec=pltpu.PrefetchScalarGridSpec(
            num_scalar_prefetch=0,
            grid=(num_blocks,),
            in_specs=[
                pl.BlockSpec((block_rows, lane), lambda i: (i, 0)),
                pl.BlockSpec((block_rows, lane), lambda i: (i, 0)),
            ],
            out_specs=pl.BlockSpec((_SUBLANE, lane), lambda i: (i, 0)),
        ),
        compiler_params=pltpu.CompilerParams(
            # Independent tiles; "parallel" lets megacore (v7x 2 TCs) split the grid.
            dimension_semantics=("parallel",),
            vmem_limit_bytes=vmem_limit,
        ),
    )(x2, y2)

    # Tiny final reduction of the lane-dense partial sums.
    return jnp.sum(partials) + tail_sum


if __name__ == "__main__":
    key = jax.random.PRNGKey(0)
    k1, k2, k3, k4 = jax.random.split(key, 4)

    N, C, H, W = 2, 4, 16, 16
    eps = 1e-6
    x = jax.random.normal(k1, (N, C, H, W), jnp.float32)
    y = jax.random.normal(k2, (N, C, H, W), jnp.float32)

    loss = charbonnier_loss_pallas(x, y, eps=eps)
    jax.block_until_ready(loss)
    ref = jnp.sum(jnp.sqrt((x - y) ** 2 + eps))
    assert jnp.allclose(loss, ref, rtol=1e-5, atol=1e-4), (loss, ref)

    # Non-divisible shape exercises the bulk + tail split and the in-kernel
    # last-block row mask.
    x2 = jax.random.normal(k3, (2, 3, 15, 17), jnp.float32)
    y2 = jax.random.normal(k4, (2, 3, 15, 17), jnp.float32)
    loss2 = charbonnier_loss_pallas(x2, y2, eps=eps)
    ref2 = jnp.sum(jnp.sqrt((x2 - y2) ** 2 + eps))
    assert jnp.allclose(loss2, ref2, rtol=1e-5, atol=1e-4), (loss2, ref2)

    # bf16 inputs stream in native dtype; math/accumulation stays f32 in-kernel.
    xb = x.astype(jnp.bfloat16)
    yb = y.astype(jnp.bfloat16)
    loss3 = charbonnier_loss_pallas(xb, yb, eps=eps)
    ref3 = jnp.sum(jnp.sqrt(
        (xb.astype(jnp.float32) - yb.astype(jnp.float32)) ** 2 + eps))
    assert jnp.allclose(loss3, ref3, rtol=1e-5, atol=1e-4), (loss3, ref3)

    jax.block_until_ready((loss, loss2, loss3))
    print("KERNEL_OK")
</pallas_src>

<mosaic_0001>
module attributes {stable_mosaic.version = 11 : i64} {
  func.func @_charbonnier_kernel(%arg0: i32, %arg1: memref<16x512xf32, #tpu.memory_space<vmem>>, %arg2: memref<16x512xf32, #tpu.memory_space<vmem>>, %arg3: memref<8x512xf32, #tpu.memory_space<vmem>>) attributes {dimension_semantics = [#tpu.dimension_semantics<parallel>], iteration_bounds = array<i64: 1>, scalar_prefetch = 0 : i64, scratch_operands = 0 : i64, tpu.core_type = #tpu.core_type<tc>, window_params = [{transform_indices = @transform_0, window_bounds = array<i64: 16, 512>}, {transform_indices = @transform_1, window_bounds = array<i64: 16, 512>}, {transform_indices = @transform_2, window_bounds = array<i64: 8, 512>}]} {
    %c0_i32 = arith.constant 0 : i32
    %0 = arith.cmpi slt, %arg0, %c0_i32 : i32
    %1 = arith.extui %0 : i1 to i32
    %c0_i32_0 = arith.constant 0 : i32
    %2 = arith.cmpi ne, %1, %c0_i32_0 : i32
    scf.if %2 {
      %cst = arith.constant 0.000000e+00 : f32
      %6 = vector.broadcast %cst : f32 to vector<8x512xf32>
      %c0 = arith.constant 0 : index
      %c0_3 = arith.constant 0 : index
      %7 = vector.load %arg1[%c0, %c0_3] : memref<16x512xf32, #tpu.memory_space<vmem>>, vector<16x512xf32>
      %c0_4 = arith.constant 0 : index
      %c0_5 = arith.constant 0 : index
      %8 = vector.load %arg2[%c0_4, %c0_5] : memref<16x512xf32, #tpu.memory_space<vmem>>, vector<16x512xf32>
      %9 = arith.subf %7, %8 : vector<16x512xf32>
      %10 = arith.mulf %9, %9 : vector<16x512xf32>
      %cst_6 = arith.constant 9.99999997E-7 : f32
      %11 = vector.broadcast %cst_6 : f32 to vector<16x512xf32>
      %12 = arith.addf %10, %11 : vector<16x512xf32>
      %13 = math.sqrt %12 : vector<16x512xf32>
      %14 = vector.shape_cast %13 : vector<16x512xf32> to vector<2x8x512xf32>
      %cst_7 = arith.constant dense<0.000000e+00> : vector<8x512xf32>
      %15 = vector.multi_reduction <add>, %14, %cst_7 [0] : vector<2x8x512xf32> to vector<8x512xf32>
      %16 = arith.addf %6, %15 : vector<8x512xf32>
      %c0_8 = arith.constant 0 : index
      %c0_9 = arith.constant 0 : index
      %17 = vector.load %arg3[%c0_8, %c0_9] : memref<8x512xf32, #tpu.memory_space<vmem>>, vector<8x512xf32>
      tpu.vector_store %arg3[%c0_8, %c0_9], %16 {strides = array<i32>} : memref<8x512xf32, #tpu.memory_space<vmem>>, vector<8x512xf32>,
    } else {
    }
    %c0_i32_1 = arith.constant 0 : i32
    %3 = arith.cmpi eq, %arg0, %c0_i32_1 : i32
    %4 = arith.extui %3 : i1 to i32
    %c0_i32_2 = arith.constant 0 : i32
    %5 = arith.cmpi ne, %4, %c0_i32_2 : i32
    scf.if %5 {
      %cst = arith.constant 0.000000e+00 : f32
      %6 = vector.broadcast %cst : f32 to vector<8x512xf32>
      %c0 = arith.constant 0 : index
      %c0_3 = arith.constant 0 : index
      %7 = vector.load %arg1[%c0, %c0_3] : memref<16x512xf32, #tpu.memory_space<vmem>>, vector<16x512xf32>
      %c0_4 = arith.constant 0 : index
      %c0_5 = arith.constant 0 : index
      %8 = vector.load %arg2[%c0_4, %c0_5] : memref<16x512xf32, #tpu.memory_space<vmem>>, vector<16x512xf32>
      %9 = arith.subf %7, %8 : vector<16x512xf32>
      %10 = arith.mulf %9, %9 : vector<16x512xf32>
      %cst_6 = arith.constant 9.99999997E-7 : f32
      %11 = vector.broadcast %cst_6 : f32 to vector<16x512xf32>
      %12 = arith.addf %10, %11 : vector<16x512xf32>
      %13 = math.sqrt %12 : vector<16x512xf32>
      %14 = tpu.iota {dimensions = array<i32: 0>} : vector<16x512xi32>
      %c4_i32 = arith.constant 4 : i32
      %15 = vector.broadcast %c4_i32 : i32 to vector<16x512xi32>
      %16 = arith.cmpi slt, %14, %15 : vector<16x512xi32>
      %cst_7 = arith.constant 0.000000e+00 : f32
      %17 = vector.broadcast %cst_7 : f32 to vector<16x512xf32>
      %18 = arith.select %16, %13, %17 : vector<16x512xi1>, vector<16x512xf32>
      %19 = vector.shape_cast %18 : vector<16x512xf32> to vector<2x8x512xf32>
      %cst_8 = arith.constant dense<0.000000e+00> : vector<8x512xf32>
      %20 = vector.multi_reduction <add>, %19, %cst_8 [0] : vector<2x8x512xf32> to vector<8x512xf32>
      %21 = arith.addf %6, %20 : vector<8x512xf32>
      %c0_9 = arith.constant 0 : index
      %c0_10 = arith.constant 0 : index
      %22 = vector.load %arg3[%c0_9, %c0_10] : memref<8x512xf32, #tpu.memory_space<vmem>>, vector<8x512xf32>
      tpu.vector_store %arg3[%c0_9, %c0_10], %21 {strides = array<i32>} : memref<8x512xf32, #tpu.memory_space<vmem>>, vector<8x512xf32>,
    } else {
    }
    return
  }
  func.func @transform_0(%arg0: i32) -> (i32, i32) {
    %c0_i32 = arith.constant 0 : i32
    %c0_i32_0 = arith.constant 0 : i32
    return %arg0, %c0_i32 : i32, i32
  }
  func.func @transform_1(%arg0: i32) -> (i32, i32) {
    %c0_i32 = arith.constant 0 : i32
    %c0_i32_0 = arith.constant 0 : i32
    return %arg0, %c0_i32 : i32, i32
  }
  func.func @transform_2(%arg0: i32) -> (i32, i32) {
    %c0_i32 = arith.constant 0 : i32
    %c0_i32_0 = arith.constant 0 : i32
    return %arg0, %c0_i32 : i32, i32
  }
}

</mosaic_0001>

<llo_original>
// kernel: tpu_custom_call.1
$region0: #{tpu_custom_call.1}
  #allocation0 [shape = 'u32[]', space=smem, size = 0x4, offset = 0x4, fixed_abs, tag = 'smem constant byte address 0x4 - core index']
  #allocation1 [shape = 'u32[144,128]{1,0:T(1,128)}', space=vmem, size = 0x12000, scoped, tag = 'internal scratch']
  %s0 = inlined_call_operand.hbm [shape: f32[4,512], index: 0, kind: input, shape index: {}]
  %s1 = inlined_call_operand.hbm [shape: f32[4,512], index: 1, kind: input, shape index: {}]
  %s2 = inlined_call_operand.hbm [shape: f32[8,512], index: 2, kind: output, shape index: {}]
  %s3 = sld [smem:[#allocation0]]
  $region34: #{tpu_custom_call.1} parent=0
    _
  %s5 = ssub.s32 1, %s3
  %s6 = scalar_select 0, %s5, %s3
  $region1: #{tpu_custom_call.1} parent=0
    #allocation2 [shape = 'u8[32768]{0}', space=vmem, size = 0x8000, scoped, tag = 'input window, operand 0, single buffered']
    #allocation3 [shape = 's32[1]{0}', space=sflag, size = 0x4, scoped, tag = 'scoped memory for tpu_custom_call.1']
    #allocation4 [shape = 's32[1]{0}', space=sflag, size = 0x4, scoped, tag = 'scoped memory for tpu_custom_call.1']
    #allocation5 [shape = 'u8[32768]{0}', space=vmem, size = 0x8000, scoped, tag = 'input window, operand 1, single buffered']
    #allocation6 [shape = 's32[1]{0}', space=sflag, size = 0x4, scoped, tag = 'scoped memory for tpu_custom_call.1']
    #allocation7 [shape = 'u8[16384]{0}', space=vmem, size = 0x4000, scoped, tag = 'output window, operand 0, single buffered']
    %7 = vsyncpa [#allocation3], 0
    %8 = vsyncpa [#allocation6], 0
    %9 = vsyncpa [#allocation4], 0
    // Predicated region
    $region2: #{tpu_custom_call.1} parent=1 // pred_check
      _
    $region3: #{tpu_custom_call.1} parent=1 // pred_check_branch
      %11 = sbr.rel (0) target = $region5
    $region4: #{tpu_custom_call.1} parent=1 // pred_region
      %s13 = ssub.s32 1024, 256
      %14 = vsyncadd [#allocation3], %s13
      %s15 = sshll.u32 [#allocation2], 4
      %s16 = int_to_ptr.vmem [resolvable:$true] %s15
      %21 = dma.hbm_to_vmem [thread:$0]  %s0, 256, %s16, [#allocation3], 256, 256, 16
    $region5: #{tpu_custom_call.1} parent=1 // pred_fallthru
      _
    // Predicated region
    $region6: #{tpu_custom_call.1} parent=1 // pred_check
      _
    $region7: #{tpu_custom_call.1} parent=1 // pred_check_branch
      %23 = sbr.rel (0) target = $region9
    $region8: #{tpu_custom_call.1} parent=1 // pred_region
      %s25 = ssub.s32 1024, 256
      %26 = vsyncadd [#allocation6], %s25
      %s27 = sshll.u32 [#allocation5], 4
      %s28 = int_to_ptr.vmem [resolvable:$true] %s27
      %33 = dma.hbm_to_vmem [thread:$0]  %s1, 256, %s28, [#allocation6], 256, 256, 16
    $region9: #{tpu_custom_call.1} parent=1 // pred_fallthru
      _
    // Predicated region
    $region10: #{tpu_custom_call.1} parent=1 // pred_check
      _
    $region11: #{tpu_custom_call.1} parent=1 // pred_check_branch
      %35 = sbr.rel (0) target = $region13
    $region12: #{tpu_custom_call.1} parent=1 // pred_region
      %36 = dma.done [#allocation3], 1024
    $region13: #{tpu_custom_call.1} parent=1 // pred_fallthru
      _
    // Predicated region
    $region14: #{tpu_custom_call.1} parent=1 // pred_check
      _
    $region15: #{tpu_custom_call.1} parent=1 // pred_check_branch
      %38 = sbr.rel (0) target = $region17
    $region16: #{tpu_custom_call.1} parent=1 // pred_region
      %39 = dma.done [#allocation6], 1024
    $region17: #{tpu_custom_call.1} parent=1 // pred_fallthru
      _
    %p40 = scmp.lt.s32.totalorder 0, 0
    // Predicated region
    $region18: #{tpu_custom_call.1} parent=1 // pred_check
      %p41 = pneg %p40
    $region19: #{tpu_custom_call.1} parent=1 // pred_check_branch
      %43 = sbr.rel (%p41) target = $region21
    $region20: #{tpu_custom_call.1} parent=1 // pred_region
      %v44 = vld [vmem:[#allocation2] sm:$0xff]
      %v45 = vld [vmem:[#allocation2 + $0x8] sm:$0xff]
      %v46 = vld [vmem:[#allocation2 + $0x10] sm:$0xff]
      %v47 = vld [vmem:[#allocation2 + $0x18] sm:$0xff]
      %v48 = vld [vmem:[#allocation2 + $0x20] sm:$0xff]
      %v49 = vld [vmem:[#allocation2 + $0x28] sm:$0xff]
      %v50 = vld [vmem:[#allocation2 + $0x30] sm:$0xff]
      %v51 = vld [vmem:[#allocation2 + $0x38] sm:$0xff]
      %v52 = vld [vmem:[#allocation5] sm:$0xff]
      %v53 = vld [vmem:[#allocation5 + $0x8] sm:$0xff]
      %v54 = vld [vmem:[#allocation5 + $0x10] sm:$0xff]
      %v55 = vld [vmem:[#allocation5 + $0x18] sm:$0xff]
      %v56 = vld [vmem:[#allocation5 + $0x20] sm:$0xff]
      %v57 = vld [vmem:[#allocation5 + $0x28] sm:$0xff]
      %v58 = vld [vmem:[#allocation5 + $0x30] sm:$0xff]
      %v59 = vld [vmem:[#allocation5 + $0x38] sm:$0xff]
      %v60 = vsub.f32 %v44, %v52
      %v61 = vsub.f32 %v45, %v53
      %v62 = vsub.f32 %v46, %v54
      %v63 = vsub.f32 %v47, %v55
      %v64 = vsub.f32 %v48, %v56
      %v65 = vsub.f32 %v49, %v57
      %v66 = vsub.f32 %v50, %v58
      %v67 = vsub.f32 %v51, %v59
      %v68 = vmul.f32 %v60, %v60
      %v69 = vmul.f32 %v61, %v61
      %v70 = vmul.f32 %v62, %v62
      %v71 = vmul.f32 %v63, %v63
      %v72 = vmul.f32 %v64, %v64
      %v73 = vmul.f32 %v65, %v65
      %v74 = vmul.f32 %v66, %v66
      %v75 = vmul.f32 %v67, %v67
      %v76 = vadd.f32 %v68, 1e-06
      %v77 = vadd.f32 %v69, 1e-06
      %v78 = vadd.f32 %v70, 1e-06
      %v79 = vadd.f32 %v71, 1e-06
      %v80 = vadd.f32 %v72, 1e-06
      %v81 = vadd.f32 %v73, 1e-06
      %v82 = vadd.f32 %v74, 1e-06
      %v83 = vadd.f32 %v75, 1e-06
      %v84 = vrsqrt.pop %v76
      %v85 = vmul.f32 %v76, %v84
      %vm86 = vcmp.eq.f32.partialorder %v76, inf
      %v87 = vsel %vm86, %v76, %v85
      %vm88 = vcmp.eq.f32.partialorder %v76, 0.0
      %v89 = vand.u32 %v76, 2147483648
      %v90 = vsel %vm88, %v89, %v87
      %v91 = vrsqrt.pop %v77
      %v92 = vmul.f32 %v77, %v91
      %vm93 = vcmp.eq.f32.partialorder %v77, inf
      %v94 = vsel %vm93, %v77, %v92
      %vm95 = vcmp.eq.f32.partialorder %v77, 0.0
      %v96 = vand.u32 %v77, 2147483648
      %v97 = vsel %vm95, %v96, %v94
      %v98 = vrsqrt.pop %v78
      %v99 = vmul.f32 %v78, %v98
      %vm100 = vcmp.eq.f32.partialorder %v78, inf
      %v101 = vsel %vm100, %v78, %v99
      %vm102 = vcmp.eq.f32.partialorder %v78, 0.0
      %v103 = vand.u32 %v78, 2147483648
      %v104 = vsel %vm102, %v103, %v101
      %v105 = vrsqrt.pop %v79
      %v106 = vmul.f32 %v79, %v105
      %vm107 = vcmp.eq.f32.partialorder %v79, inf
      %v108 = vsel %vm107, %v79, %v106
      %vm109 = vcmp.eq.f32.partialorder %v79, 0.0
      %v110 = vand.u32 %v79, 2147483648
      %v111 = vsel %vm109, %v110, %v108
      %v112 = vrsqrt.pop %v80
      %v113 = vmul.f32 %v80, %v112
      %vm114 = vcmp.eq.f32.partialorder %v80, inf
      %v115 = vsel %vm114, %v80, %v113
      %vm116 = vcmp.eq.f32.partialorder %v80, 0.0
      %v117 = vand.u32 %v80, 2147483648
      %v118 = vsel %vm116, %v117, %v115
      %v119 = vrsqrt.pop %v81
      %v120 = vmul.f32 %v81, %v119
      %vm121 = vcmp.eq.f32.partialorder %v81, inf
      %v122 = vsel %vm121, %v81, %v120
      %vm123 = vcmp.eq.f32.partialorder %v81, 0.0
      %v124 = vand.u32 %v81, 2147483648
      %v125 = vsel %vm123, %v124, %v122
      %v126 = vrsqrt.pop %v82
      %v127 = vmul.f32 %v82, %v126
      %vm128 = vcmp.eq.f32.partialorder %v82, inf
      %v129 = vsel %vm128, %v82, %v127
      %vm130 = vcmp.eq.f32.partialorder %v82, 0.0
      %v131 = vand.u32 %v82, 2147483648
      %v132 = vsel %vm130, %v131, %v129
      %v133 = vrsqrt.pop %v83
      %v134 = vmul.f32 %v83, %v133
      %vm135 = vcmp.eq.f32.partialorder %v83, inf
      %v136 = vsel %vm135, %v83, %v134
      %vm137 = vcmp.eq.f32.partialorder %v83, 0.0
      %v138 = vand.u32 %v83, 2147483648
      %v139 = vsel %vm137, %v138, %v136
      %v148 = vcombine.low %v90, %v104
      %v149 = vcombine.high %v90, %v104
      %v150 = vcombine.low %v97, %v111
      %v151 = vcombine.high %v97, %v111
      %v152 = vcombine.low %v118, %v132
      %v153 = vcombine.high %v118, %v132
      %v154 = vcombine.low %v125, %v139
      %v155 = vcombine.high %v125, %v139
      %v164 = vadd.f32 %v148, %v152
      %v165 = vadd.f32 %v149, %v153
      %v166 = vadd.f32 %v150, %v154
      %v167 = vadd.f32 %v151, %v155
      %v168 = vadd.f32 %v164, 0.0
      %v169 = vadd.f32 %v165, 0.0
      %v170 = vadd.f32 %v166, 0.0
      %v171 = vadd.f32 %v167, 0.0
      %172 = vst [vmem:[#allocation7] sm:$0xff] %v168
      %173 = vst [vmem:[#allocation7 + $0x8] sm:$0xff] %v169
      %174 = vst [vmem:[#allocation7 + $0x10] sm:$0xff] %v170
      %175 = vst [vmem:[#allocation7 + $0x18] sm:$0xff] %v171
    $region21: #{tpu_custom_call.1} parent=1 // pred_fallthru
      _
    %p176 = scmp.eq.s32.totalorder 0, 0
    // Predicated region
    $region22: #{tpu_custom_call.1} parent=1 // pred_check
      %p177 = pneg %p176
    $region23: #{tpu_custom_call.1} parent=1 // pred_check_branch
      %179 = sbr.rel (%p177) target = $region25
    $region24: #{tpu_custom_call.1} parent=1 // pred_region
      %v180 = vld [vmem:[#allocation2] sm:$0xff]
      %v181 = vld [vmem:[#allocation2 + $0x8] sm:$0xff]
      %v182 = vld [vmem:[#allocation2 + $0x10] sm:$0xff]
      %v183 = vld [vmem:[#allocation2 + $0x18] sm:$0xff]
      %v184 = vld [vmem:[#allocation2 + $0x20] sm:$0xff]
      %v185 = vld [vmem:[#allocation2 + $0x28] sm:$0xff]
      %v186 = vld [vmem:[#allocation2 + $0x30] sm:$0xff]
      %v187 = vld [vmem:[#allocation2 + $0x38] sm:$0xff]
      %v188 = vld [vmem:[#allocation5] sm:$0xff]
      %v189 = vld [vmem:[#allocation5 + $0x8] sm:$0xff]
      %v190 = vld [vmem:[#allocation5 + $0x10] sm:$0xff]
      %v191 = vld [vmem:[#allocation5 + $0x18] sm:$0xff]
      %v192 = vld [vmem:[#allocation5 + $0x20] sm:$0xff]
      %v193 = vld [vmem:[#allocation5 + $0x28] sm:$0xff]
      %v194 = vld [vmem:[#allocation5 + $0x30] sm:$0xff]
      %v195 = vld [vmem:[#allocation5 + $0x38] sm:$0xff]
      %v196 = vsub.f32 %v180, %v188
      %v197 = vsub.f32 %v181, %v189
      %v198 = vsub.f32 %v182, %v190
      %v199 = vsub.f32 %v183, %v191
      %v200 = vsub.f32 %v184, %v192
      %v201 = vsub.f32 %v185, %v193
      %v202 = vsub.f32 %v186, %v194
      %v203 = vsub.f32 %v187, %v195
      %v204 = vmul.f32 %v196, %v196
      %v205 = vmul.f32 %v197, %v197
      %v206 = vmul.f32 %v198, %v198
      %v207 = vmul.f32 %v199, %v199
      %v208 = vmul.f32 %v200, %v200
      %v209 = vmul.f32 %v201, %v201
      %v210 = vmul.f32 %v202, %v202
      %v211 = vmul.f32 %v203, %v203
      %v212 = vadd.f32 %v204, 1e-06
      %v213 = vadd.f32 %v205, 1e-06
      %v214 = vadd.f32 %v206, 1e-06
      %v215 = vadd.f32 %v207, 1e-06
      %v216 = vadd.f32 %v208, 1e-06
      %v217 = vadd.f32 %v209, 1e-06
      %v218 = vadd.f32 %v210, 1e-06
      %v219 = vadd.f32 %v211, 1e-06
      %v220 = vrsqrt.pop %v212
      %v221 = vmul.f32 %v212, %v220
      %vm222 = vcmp.eq.f32.partialorder %v212, inf
      %v223 = vsel %vm222, %v212, %v221
      %vm224 = vcmp.eq.f32.partialorder %v212, 0.0
      %v225 = vand.u32 %v212, 2147483648
      %v226 = vsel %vm224, %v225, %v223
      %v227 = vrsqrt.pop %v213
      %v228 = vmul.f32 %v213, %v227
      %vm229 = vcmp.eq.f32.partialorder %v213, inf
      %v230 = vsel %vm229, %v213, %v228
      %vm231 = vcmp.eq.f32.partialorder %v213, 0.0
      %v232 = vand.u32 %v213, 2147483648
      %v233 = vsel %vm231, %v232, %v230
      %v234 = vrsqrt.pop %v214
      %v235 = vmul.f32 %v214, %v234
      %vm236 = vcmp.eq.f32.partialorder %v214, inf
      %v237 = vsel %vm236, %v214, %v235
      %vm238 = vcmp.eq.f32.partialorder %v214, 0.0
      %v239 = vand.u32 %v214, 2147483648
      %v240 = vsel %vm238, %v239, %v237
      %v241 = vrsqrt.pop %v215
      %v242 = vmul.f32 %v215, %v241
      %vm243 = vcmp.eq.f32.partialorder %v215, inf
      %v244 = vsel %vm243, %v215, %v242
      %vm245 = vcmp.eq.f32.partialorder %v215, 0.0
      %v246 = vand.u32 %v215, 2147483648
      %v247 = vsel %vm245, %v246, %v244
      %v248 = vrsqrt.pop %v216
      %v249 = vmul.f32 %v216, %v248
      %vm250 = vcmp.eq.f32.partialorder %v216, inf
      %v251 = vsel %vm250, %v216, %v249
      %vm252 = vcmp.eq.f32.partialorder %v216, 0.0
      %v253 = vand.u32 %v216, 2147483648
      %v254 = vsel %vm252, %v253, %v251
      %v255 = vrsqrt.pop %v217
      %v256 = vmul.f32 %v217, %v255
      %vm257 = vcmp.eq.f32.partialorder %v217, inf
      %v258 = vsel %vm257, %v217, %v256
      %vm259 = vcmp.eq.f32.partialorder %v217, 0.0
      %v260 = vand.u32 %v217, 2147483648
      %v261 = vsel %vm259, %v260, %v258
      %v262 = vrsqrt.pop %v218
      %v263 = vmul.f32 %v218, %v262
      %vm264 = vcmp.eq.f32.partialorder %v218, inf
      %v265 = vsel %vm264, %v218, %v263
      %vm266 = vcmp.eq.f32.partialorder %v218, 0.0
      %v267 = vand.u32 %v218, 2147483648
      %v268 = vsel %vm266, %v267, %v265
      %v269 = vrsqrt.pop %v219
      %v270 = vmul.f32 %v219, %v269
      %vm271 = vcmp.eq.f32.partialorder %v219, inf
      %v272 = vsel %vm271, %v219, %v270
      %vm273 = vcmp.eq.f32.partialorder %v219, 0.0
      %v274 = vand.u32 %v219, 2147483648
      %v275 = vsel %vm273, %v274, %v272
      %v276 = vlaneseq
      %v277 = vshrl.u32 %v276, 7
      %v278 = vadd.s32 %v277, 8
      %vm279 = vcmp.lt.s32.totalorder %v277, 4
      %vm280 = vcmp.lt.s32.totalorder %v278, 4
      %v289 = vcombine.low %v226, %v240
      %v290 = vcombine.high %v226, %v240
      %v291 = vcombine.low %v233, %v247
      %v292 = vcombine.high %v233, %v247
      %v293 = vcombine.low %v254, %v268
      %v294 = vcombine.high %v254, %v268
      %v295 = vcombine.low %v261, %v275
      %v296 = vcombine.high %v261, %v275
      %v305 = vsel %vm279, %v289, 0.0
      %v306 = vsel %vm279, %v290, 0.0
      %v307 = vsel %vm279, %v291, 0.0
      %v308 = vsel %vm279, %v292, 0.0
      %v309 = vsel %vm280, %v293, 0.0
      %v310 = vsel %vm280, %v294, 0.0
      %v311 = vsel %vm280, %v295, 0.0
      %v312 = vsel %vm280, %v296, 0.0
      %v313 = vadd.f32 %v305, %v309
      %v314 = vadd.f32 %v306, %v310
      %v315 = vadd.f32 %v307, %v311
      %v316 = vadd.f32 %v308, %v312
      %v317 = vadd.f32 %v313, 0.0
      %v318 = vadd.f32 %v314, 0.0
      %v319 = vadd.f32 %v315, 0.0
      %v320 = vadd.f32 %v316, 0.0
      %321 = vst [vmem:[#allocation7] sm:$0xff] %v317
      %322 = vst [vmem:[#allocation7 + $0x8] sm:$0xff] %v318
      %323 = vst [vmem:[#allocation7 + $0x10] sm:$0xff] %v319
      %324 = vst [vmem:[#allocation7 + $0x18] sm:$0xff] %v320
    $region25: #{tpu_custom_call.1} parent=1 // pred_fallthru
      _
    // Predicated region
    $region26: #{tpu_custom_call.1} parent=1 // pred_check
      _
    $region27: #{tpu_custom_call.1} parent=1 // pred_check_branch
      %326 = sbr.rel (0) target = $region29
    $region28: #{tpu_custom_call.1} parent=1 // pred_region
      %s328 = ssub.s32 512, 512
      %329 = vsyncadd [#allocation4], %s328
      %s331 = sshll.u32 [#allocation7], 4
      %s332 = int_to_ptr.vmem [resolvable:$true] %s331
      %334 = dma.vmem_to_hbm [thread:$0]  %s332, 512, %s2, [#allocation4]
    $region29: #{tpu_custom_call.1} parent=1 // pred_fallthru
      _
    // Predicated region
    $region30: #{tpu_custom_call.1} parent=1 // pred_check
      _
    $region31: #{tpu_custom_call.1} parent=1 // pred_check_branch
      %336 = sbr.rel (0) target = $region33
    $region32: #{tpu_custom_call.1} parent=1 // pred_region
      %337 = dma.done [#allocation4], 512
    $region33: #{tpu_custom_call.1} parent=1 // pred_fallthru
      _
    %338 = vsyncpa [#allocation3], 1
    %339 = vsyncpa [#allocation6], 1
    %340 = vsyncpa [#allocation4], 1

</llo_original>
